<compile_context>
chip_gen: v7x
topology: tpu7x:2x2x1
jax: 0.10.0
libtpu: 0.0.40
codegen_flags: <defaults>
</compile_context>

<pallas_src>
import functools

import jax
import jax.numpy as jnp
import numpy as np
from jax.experimental import pallas as pl
from jax.experimental.pallas import tpu as pltpu

_EPS = 1e-5


def _spatial_encoder2_kernel(x_ref, w_ref, bm_ref, bias_ref, o_ref, *, W, b_tile):
    # x_ref:    (b_tile, C, HWp) VMEM, native dtype, channel planes flattened
    # w_ref:    (10, C)          VMEM, rows 0..8 = conv1 taps (t = ky*3+kx), row 9 = conv2
    # bm_ref:   (4, HWp)         VMEM, 0/1 base masks [top_ok, bot_ok, left_ok, right_ok]
    # bias_ref: (1,)             SMEM, folded BN1 + BN2 bias
    # o_ref:    (b_tile, 1, HWp) VMEM
    HWp = x_ref.shape[2]

    w = w_ref[...]                              # (10, C), compute dtype
    bias = bias_ref[0]                          # scalar f32

    top = bm_ref[0:1, :]                        # i - 1 >= 0
    bot = bm_ref[1:2, :]                        # i + 1 <  H
    left = bm_ref[2:3, :]                       # j - 1 >= 0
    right = bm_ref[3:4, :]                      # j + 1 <  W

    for b in range(b_tile):
        xb = x_ref[b]                           # (C, HWp), native dtype (no f32 copy)

        # Channel reduction for all 9 conv1 taps + conv2 BEFORE any spatial shift.
        parts = jnp.dot(w, xb, preferred_element_type=jnp.float32)   # (10, HWp) MXU

        # Channel max fused into the same pass over the already-loaded planes.
        cmax = jnp.max(xb, axis=0, keepdims=True).astype(jnp.float32)  # (1, HWp)

        # Vertical (oy = -1 / +1) offsets as grouped slab rolls: the 3 taps that
        # share an oy sit in adjacent sublanes, so one (3, HWp) roll covers them.
        topg = pltpu.roll(parts[0:3], shift=W, axis=1)          # oy = -1
        midg = parts[3:6]                                       # oy =  0
        botg = pltpu.roll(parts[6:9], shift=HWp - W, axis=1)    # oy = +1

        def tap3(g, vmask):
            # g rows carry ox = -1, 0, +1.  Tap mask = vertical_ok * horizontal_ok,
            # applied as plain multiplies; vertical mask factored out of the group.
            l = pltpu.roll(g[0:1], shift=1, axis=1) * left
            m = g[1:2]
            r = pltpu.roll(g[2:3], shift=HWp - 1, axis=1) * right
            s = (l + r) + m
            return s * vmask if vmask is not None else s

        taps = tap3(topg, top) + tap3(midg, None) + tap3(botg, bot)   # (1, HWp)

        out = taps + parts[9:10, :] + cmax + bias
        o_ref[b] = out.astype(o_ref.dtype)


def _base_masks(H, W, HWp):
    """(4, HWp) f32 0/1 masks: [i>0, i<H-1, j>0, j<W-1], zero in the pad region."""
    ii, jj = np.meshgrid(np.arange(H), np.arange(W), indexing="ij")
    m = np.stack([ii >= 1, ii <= H - 2, jj >= 1, jj <= W - 2]).astype(np.float32)
    m = m.reshape(4, H * W)
    if HWp != H * W:
        m = np.pad(m, ((0, 0), (0, HWp - H * W)))
    return m


def spatial_encoder2(x, params):
    B, C, H, W = x.shape
    HW = H * W
    HWp = ((HW + 127) // 128) * 128          # lane-dense flat spatial length

    # Fold eval-mode BatchNorm (1 channel each) into conv weights + one bias.
    a1 = params["bn1_gamma"] / jnp.sqrt(params["bn1_var"] + _EPS)   # (1,)
    b1 = params["bn1_beta"] - params["bn1_mean"] * a1               # (1,)
    a2 = params["bn2_gamma"] / jnp.sqrt(params["bn2_var"] + _EPS)   # (1,)
    b2 = params["bn2_beta"] - params["bn2_mean"] * a2               # (1,)

    # conv1_w: (1, C, 3, 3) -> rows t = ky*3+kx of shape (C,); conv2_w row appended.
    w1_rows = (params["conv1_w"][0] * a1).transpose(1, 2, 0).reshape(9, C)
    w2_row = (params["conv2_w"][0, :, 0, 0] * a2)[None, :]
    w_all = jnp.concatenate([w1_rows, w2_row], axis=0)             # (10, C)
    # Feed the MXU in the activation dtype (bf16 in, f32 accumulate); else f32.
    w_dtype = x.dtype if x.dtype == jnp.bfloat16 else jnp.float32
    w_all = w_all.astype(w_dtype)
    bias = (b1 + b2).reshape(1).astype(jnp.float32)

    base_masks = jnp.asarray(_base_masks(H, W, HWp))               # (4, HWp) f32

    x_flat = x.reshape(B, C, HW)
    if HWp != HW:
        x_flat = jnp.pad(x_flat, ((0, 0), (0, 0), (0, HWp - HW)))

    # Batch tiling: fold as many batch elements per grid step as a modest VMEM
    # budget allows (whole batch for the demo shape -> single grid step).
    per_batch_bytes = C * HWp * x.dtype.itemsize
    budget = 8 * 1024 * 1024
    b_tile = max(1, min(B, 8, budget // max(per_batch_bytes, 1)))
    while B % b_tile != 0:
        b_tile -= 1

    blk_bytes = b_tile * per_batch_bytes
    vmem_limit = int(min(96 * 1024 * 1024, max(16 * 1024 * 1024, 6 * blk_bytes)))

    kernel = functools.partial(_spatial_encoder2_kernel, W=W, b_tile=b_tile)
    out_flat = pl.pallas_call(
        kernel,
        out_shape=jax.ShapeDtypeStruct((B, 1, HWp), x.dtype),
        grid=(B // b_tile,),
        in_specs=[
            pl.BlockSpec((b_tile, C, HWp), lambda i: (i, 0, 0)),
            pl.BlockSpec((10, C), lambda i: (0, 0)),
            pl.BlockSpec((4, HWp), lambda i: (0, 0)),
            pl.BlockSpec(memory_space=pltpu.MemorySpace.SMEM),
        ],
        out_specs=pl.BlockSpec((b_tile, 1, HWp), lambda i: (i, 0, 0)),
        compiler_params=pltpu.CompilerParams(
            dimension_semantics=("parallel",),
            vmem_limit_bytes=vmem_limit,
        ),
    )(x_flat, w_all, base_masks, bias)

    return out_flat[:, :, :HW].reshape(B, 1, H, W)


def reference(x, params):
    """Pure-JAX reference (mirrors the PyTorch forward with eval-mode BN)."""
    dn = jax.lax.conv_dimension_numbers(
        x.shape, params["conv1_w"].shape, ("NCHW", "OIHW", "NCHW"))
    c1 = jax.lax.conv_general_dilated(
        x, params["conv1_w"], (1, 1), ((1, 1), (1, 1)), dimension_numbers=dn)
    c2 = jax.lax.conv_general_dilated(
        x, params["conv2_w"], (1, 1), "VALID", dimension_numbers=dn)

    def bn(y, g, b, m, v):
        g = g.reshape(1, -1, 1, 1)
        b = b.reshape(1, -1, 1, 1)
        m = m.reshape(1, -1, 1, 1)
        v = v.reshape(1, -1, 1, 1)
        return g * (y - m) / jnp.sqrt(v + _EPS) + b

    out1 = bn(c1, params["bn1_gamma"], params["bn1_beta"],
              params["bn1_mean"], params["bn1_var"])
    out2 = bn(c2, params["bn2_gamma"], params["bn2_beta"],
              params["bn2_mean"], params["bn2_var"])
    out3 = jnp.max(x, axis=1, keepdims=True)
    return out1 + out2 + out3


def init_params(key, inplanes):
    ks = jax.random.split(key, 10)
    return {
        "conv1_w": 0.1 * jax.random.normal(ks[0], (1, inplanes, 3, 3), jnp.float32),
        "conv2_w": 0.1 * jax.random.normal(ks[1], (1, inplanes, 1, 1), jnp.float32),
        "bn1_gamma": 1.0 + 0.1 * jax.random.normal(ks[2], (1,), jnp.float32),
        "bn1_beta": 0.1 * jax.random.normal(ks[3], (1,), jnp.float32),
        "bn1_mean": 0.1 * jax.random.normal(ks[4], (1,), jnp.float32),
        "bn1_var": jnp.abs(1.0 + 0.1 * jax.random.normal(ks[5], (1,), jnp.float32)),
        "bn2_gamma": 1.0 + 0.1 * jax.random.normal(ks[6], (1,), jnp.float32),
        "bn2_beta": 0.1 * jax.random.normal(ks[7], (1,), jnp.float32),
        "bn2_mean": 0.1 * jax.random.normal(ks[8], (1,), jnp.float32),
        "bn2_var": jnp.abs(1.0 + 0.1 * jax.random.normal(ks[9], (1,), jnp.float32)),
    }


if __name__ == "__main__":
    key = jax.random.PRNGKey(0)
    kx, kp = jax.random.split(key)

    B, C, H, W = 2, 4, 16, 16   # inplanes = 4
    x = jax.random.normal(kx, (B, C, H, W), jnp.float32)
    params = init_params(kp, C)

    out = jax.block_until_ready(spatial_encoder2(x, params))
    ref = jax.block_until_ready(reference(x, params))

    assert out.shape == (B, 1, H, W), out.shape
    assert np.allclose(np.asarray(out), np.asarray(ref), rtol=1e-4, atol=1e-4), (
        float(np.max(np.abs(np.asarray(out) - np.asarray(ref)))))
    print("KERNEL_OK")
</pallas_src>

<mosaic_0001>
module attributes {stable_mosaic.version = 11 : i64} {
  func.func @_spatial_encoder2_kernel(%arg0: i32, %arg1: memref<2x4x256xf32, #tpu.memory_space<vmem>>, %arg2: memref<10x4xf32, #tpu.memory_space<vmem>>, %arg3: memref<4x256xf32, #tpu.memory_space<vmem>>, %arg4: memref<1xf32, #tpu.memory_space<smem>>, %arg5: memref<2x1x256xf32, #tpu.memory_space<vmem>>) attributes {dimension_semantics = [#tpu.dimension_semantics<parallel>], iteration_bounds = array<i64: 1>, scalar_prefetch = 0 : i64, scratch_operands = 0 : i64, tpu.core_type = #tpu.core_type<tc>, window_params = [{transform_indices = @transform_0, window_bounds = array<i64: 2, 4, 256>}, {pipeline_mode = #tpu.pipeline_mode<synchronous>, transform_indices = @transform_1, window_bounds = array<i64: 10, 4>}, {pipeline_mode = #tpu.pipeline_mode<synchronous>, transform_indices = @transform_2, window_bounds = array<i64: 4, 256>}, {transform_indices = @transform_3, window_bounds = array<i64: 1>}, {transform_indices = @transform_4, window_bounds = array<i64: 2, 1, 256>}]} {
    %c0 = arith.constant 0 : index
    %c0_0 = arith.constant 0 : index
    %0 = vector.load %arg2[%c0, %c0_0] : memref<10x4xf32, #tpu.memory_space<vmem>>, vector<10x4xf32>
    %c0_1 = arith.constant 0 : index
    %1 = memref.load %arg4[%c0_1] : memref<1xf32, #tpu.memory_space<smem>>
    %c0_2 = arith.constant 0 : index
    %c0_3 = arith.constant 0 : index
    %2 = vector.load %arg3[%c0_2, %c0_3] : memref<4x256xf32, #tpu.memory_space<vmem>>, vector<1x256xf32>
    %c1 = arith.constant 1 : index
    %c0_4 = arith.constant 0 : index
    %3 = vector.load %arg3[%c1, %c0_4] : memref<4x256xf32, #tpu.memory_space<vmem>>, vector<1x256xf32>
    %c2 = arith.constant 2 : index
    %c0_5 = arith.constant 0 : index
    %4 = vector.load %arg3[%c2, %c0_5] : memref<4x256xf32, #tpu.memory_space<vmem>>, vector<1x256xf32>
    %c3 = arith.constant 3 : index
    %c0_6 = arith.constant 0 : index
    %5 = vector.load %arg3[%c3, %c0_6] : memref<4x256xf32, #tpu.memory_space<vmem>>, vector<1x256xf32>
    %c0_7 = arith.constant 0 : index
    %c0_8 = arith.constant 0 : index
    %c0_9 = arith.constant 0 : index
    %6 = vector.load %arg1[%c0_7, %c0_8, %c0_9] : memref<2x4x256xf32, #tpu.memory_space<vmem>>, vector<1x4x256xf32>
    %7 = vector.shape_cast %6 : vector<1x4x256xf32> to vector<4x256xf32>
    %cst = arith.constant dense<0.000000e+00> : vector<10x256xf32>
    %8 = tpu.matmul %0, %7, %cst {dimension_numbers = #tpu.dot_dimension_numbers<[1], [0], [0], [1], [0, 0, 1, 1], [], []>} : vector<10x4xf32>, vector<4x256xf32>, vector<10x256xf32> -> vector<10x256xf32>
    %cst_10 = arith.constant dense<0xFF800000> : vector<256xf32>
    %9 = vector.multi_reduction <maximumf>, %7, %cst_10 [0] : vector<4x256xf32> to vector<256xf32>
    %10 = vector.shape_cast %9 : vector<256xf32> to vector<1x256xf32>
    %11 = vector.extract_strided_slice %8 {offsets = [0, 0], sizes = [3, 256], strides = [1, 1]} : vector<10x256xf32> to vector<3x256xf32>
    %c16_i32 = arith.constant 16 : i32
    %12 = tpu.dynamic_rotate %11 by %c16_i32 dim 1 : vector<3x256xf32>, i32 -> vector<3x256xf32>
    %13 = vector.extract_strided_slice %8 {offsets = [3, 0], sizes = [3, 256], strides = [1, 1]} : vector<10x256xf32> to vector<3x256xf32>
    %14 = vector.extract_strided_slice %8 {offsets = [6, 0], sizes = [3, 256], strides = [1, 1]} : vector<10x256xf32> to vector<3x256xf32>
    %c240_i32 = arith.constant 240 : i32
    %15 = tpu.dynamic_rotate %14 by %c240_i32 dim 1 : vector<3x256xf32>, i32 -> vector<3x256xf32>
    %16 = vector.extract_strided_slice %12 {offsets = [0, 0], sizes = [1, 256], strides = [1, 1]} : vector<3x256xf32> to vector<1x256xf32>
    %c1_i32 = arith.constant 1 : i32
    %17 = tpu.dynamic_rotate %16 by %c1_i32 dim 1 : vector<1x256xf32>, i32 -> vector<1x256xf32>
    %18 = arith.mulf %17, %4 : vector<1x256xf32>
    %19 = vector.extract_strided_slice %12 {offsets = [1, 0], sizes = [1, 256], strides = [1, 1]} : vector<3x256xf32> to vector<1x256xf32>
    %20 = vector.extract_strided_slice %12 {offsets = [2, 0], sizes = [1, 256], strides = [1, 1]} : vector<3x256xf32> to vector<1x256xf32>
    %c255_i32 = arith.constant 255 : i32
    %21 = tpu.dynamic_rotate %20 by %c255_i32 dim 1 : vector<1x256xf32>, i32 -> vector<1x256xf32>
    %22 = arith.mulf %21, %5 : vector<1x256xf32>
    %23 = arith.addf %18, %22 : vector<1x256xf32>
    %24 = arith.addf %23, %19 : vector<1x256xf32>
    %25 = arith.mulf %24, %2 : vector<1x256xf32>
    %26 = vector.extract_strided_slice %13 {offsets = [0, 0], sizes = [1, 256], strides = [1, 1]} : vector<3x256xf32> to vector<1x256xf32>
    %c1_i32_11 = arith.constant 1 : i32
    %27 = tpu.dynamic_rotate %26 by %c1_i32_11 dim 1 : vector<1x256xf32>, i32 -> vector<1x256xf32>
    %28 = arith.mulf %27, %4 : vector<1x256xf32>
    %29 = vector.extract_strided_slice %13 {offsets = [1, 0], sizes = [1, 256], strides = [1, 1]} : vector<3x256xf32> to vector<1x256xf32>
    %30 = vector.extract_strided_slice %13 {offsets = [2, 0], sizes = [1, 256], strides = [1, 1]} : vector<3x256xf32> to vector<1x256xf32>
    %c255_i32_12 = arith.constant 255 : i32
    %31 = tpu.dynamic_rotate %30 by %c255_i32_12 dim 1 : vector<1x256xf32>, i32 -> vector<1x256xf32>
    %32 = arith.mulf %31, %5 : vector<1x256xf32>
    %33 = arith.addf %28, %32 : vector<1x256xf32>
    %34 = arith.addf %33, %29 : vector<1x256xf32>
    %35 = arith.addf %25, %34 : vector<1x256xf32>
    %36 = vector.extract_strided_slice %15 {offsets = [0, 0], sizes = [1, 256], strides = [1, 1]} : vector<3x256xf32> to vector<1x256xf32>
    %c1_i32_13 = arith.constant 1 : i32
    %37 = tpu.dynamic_rotate %36 by %c1_i32_13 dim 1 : vector<1x256xf32>, i32 -> vector<1x256xf32>
    %38 = arith.mulf %37, %4 : vector<1x256xf32>
    %39 = vector.extract_strided_slice %15 {offsets = [1, 0], sizes = [1, 256], strides = [1, 1]} : vector<3x256xf32> to vector<1x256xf32>
    %40 = vector.extract_strided_slice %15 {offsets = [2, 0], sizes = [1, 256], strides = [1, 1]} : vector<3x256xf32> to vector<1x256xf32>
    %c255_i32_14 = arith.constant 255 : i32
    %41 = tpu.dynamic_rotate %40 by %c255_i32_14 dim 1 : vector<1x256xf32>, i32 -> vector<1x256xf32>
    %42 = arith.mulf %41, %5 : vector<1x256xf32>
    %43 = arith.addf %38, %42 : vector<1x256xf32>
    %44 = arith.addf %43, %39 : vector<1x256xf32>
    %45 = arith.mulf %44, %3 : vector<1x256xf32>
    %46 = arith.addf %35, %45 : vector<1x256xf32>
    %47 = vector.extract_strided_slice %8 {offsets = [9, 0], sizes = [1, 256], strides = [1, 1]} : vector<10x256xf32> to vector<1x256xf32>
    %48 = arith.addf %46, %47 : vector<1x256xf32>
    %49 = arith.addf %48, %10 : vector<1x256xf32>
    %50 = vector.broadcast %1 : f32 to vector<1x256xf32>
    %51 = arith.addf %49, %50 : vector<1x256xf32>
    %c0_15 = arith.constant 0 : index
    %c0_16 = arith.constant 0 : index
    %c0_17 = arith.constant 0 : index
    %52 = vector.load %arg5[%c0_15, %c0_16, %c0_17] : memref<2x1x256xf32, #tpu.memory_space<vmem>>, vector<1x1x256xf32>
    %53 = vector.shape_cast %52 : vector<1x1x256xf32> to vector<1x256xf32>
    %54 = vector.shape_cast %51 : vector<1x256xf32> to vector<1x1x256xf32>
    tpu.vector_store %arg5[%c0_15, %c0_16, %c0_17], %54 {strides = array<i32>} : memref<2x1x256xf32, #tpu.memory_space<vmem>>, vector<1x1x256xf32>,
    %c1_18 = arith.constant 1 : index
    %c0_19 = arith.constant 0 : index
    %c0_20 = arith.constant 0 : index
    %55 = vector.load %arg1[%c1_18, %c0_19, %c0_20] : memref<2x4x256xf32, #tpu.memory_space<vmem>>, vector<1x4x256xf32>
    %56 = vector.shape_cast %55 : vector<1x4x256xf32> to vector<4x256xf32>
    %cst_21 = arith.constant dense<0.000000e+00> : vector<10x256xf32>
    %57 = tpu.matmul %0, %56, %cst_21 {dimension_numbers = #tpu.dot_dimension_numbers<[1], [0], [0], [1], [0, 0, 1, 1], [], []>} : vector<10x4xf32>, vector<4x256xf32>, vector<10x256xf32> -> vector<10x256xf32>
    %cst_22 = arith.constant dense<0xFF800000> : vector<256xf32>
    %58 = vector.multi_reduction <maximumf>, %56, %cst_22 [0] : vector<4x256xf32> to vector<256xf32>
    %59 = vector.shape_cast %58 : vector<256xf32> to vector<1x256xf32>
    %60 = vector.extract_strided_slice %57 {offsets = [0, 0], sizes = [3, 256], strides = [1, 1]} : vector<10x256xf32> to vector<3x256xf32>
    %c16_i32_23 = arith.constant 16 : i32
    %61 = tpu.dynamic_rotate %60 by %c16_i32_23 dim 1 : vector<3x256xf32>, i32 -> vector<3x256xf32>
    %62 = vector.extract_strided_slice %57 {offsets = [3, 0], sizes = [3, 256], strides = [1, 1]} : vector<10x256xf32> to vector<3x256xf32>
    %63 = vector.extract_strided_slice %57 {offsets = [6, 0], sizes = [3, 256], strides = [1, 1]} : vector<10x256xf32> to vector<3x256xf32>
    %c240_i32_24 = arith.constant 240 : i32
    %64 = tpu.dynamic_rotate %63 by %c240_i32_24 dim 1 : vector<3x256xf32>, i32 -> vector<3x256xf32>
    %65 = vector.extract_strided_slice %61 {offsets = [0, 0], sizes = [1, 256], strides = [1, 1]} : vector<3x256xf32> to vector<1x256xf32>
    %c1_i32_25 = arith.constant 1 : i32
    %66 = tpu.dynamic_rotate %65 by %c1_i32_25 dim 1 : vector<1x256xf32>, i32 -> vector<1x256xf32>
    %67 = arith.mulf %66, %4 : vector<1x256xf32>
    %68 = vector.extract_strided_slice %61 {offsets = [1, 0], sizes = [1, 256], strides = [1, 1]} : vector<3x256xf32> to vector<1x256xf32>
    %69 = vector.extract_strided_slice %61 {offsets = [2, 0], sizes = [1, 256], strides = [1, 1]} : vector<3x256xf32> to vector<1x256xf32>
    %c255_i32_26 = arith.constant 255 : i32
    %70 = tpu.dynamic_rotate %69 by %c255_i32_26 dim 1 : vector<1x256xf32>, i32 -> vector<1x256xf32>
    %71 = arith.mulf %70, %5 : vector<1x256xf32>
    %72 = arith.addf %67, %71 : vector<1x256xf32>
    %73 = arith.addf %72, %68 : vector<1x256xf32>
    %74 = arith.mulf %73, %2 : vector<1x256xf32>
    %75 = vector.extract_strided_slice %62 {offsets = [0, 0], sizes = [1, 256], strides = [1, 1]} : vector<3x256xf32> to vector<1x256xf32>
    %c1_i32_27 = arith.constant 1 : i32
    %76 = tpu.dynamic_rotate %75 by %c1_i32_27 dim 1 : vector<1x256xf32>, i32 -> vector<1x256xf32>
    %77 = arith.mulf %76, %4 : vector<1x256xf32>
    %78 = vector.extract_strided_slice %62 {offsets = [1, 0], sizes = [1, 256], strides = [1, 1]} : vector<3x256xf32> to vector<1x256xf32>
    %79 = vector.extract_strided_slice %62 {offsets = [2, 0], sizes = [1, 256], strides = [1, 1]} : vector<3x256xf32> to vector<1x256xf32>
    %c255_i32_28 = arith.constant 255 : i32
    %80 = tpu.dynamic_rotate %79 by %c255_i32_28 dim 1 : vector<1x256xf32>, i32 -> vector<1x256xf32>
    %81 = arith.mulf %80, %5 : vector<1x256xf32>
    %82 = arith.addf %77, %81 : vector<1x256xf32>
    %83 = arith.addf %82, %78 : vector<1x256xf32>
    %84 = arith.addf %74, %83 : vector<1x256xf32>
    %85 = vector.extract_strided_slice %64 {offsets = [0, 0], sizes = [1, 256], strides = [1, 1]} : vector<3x256xf32> to vector<1x256xf32>
    %c1_i32_29 = arith.constant 1 : i32
    %86 = tpu.dynamic_rotate %85 by %c1_i32_29 dim 1 : vector<1x256xf32>, i32 -> vector<1x256xf32>
    %87 = arith.mulf %86, %4 : vector<1x256xf32>
    %88 = vector.extract_strided_slice %64 {offsets = [1, 0], sizes = [1, 256], strides = [1, 1]} : vector<3x256xf32> to vector<1x256xf32>
    %89 = vector.extract_strided_slice %64 {offsets = [2, 0], sizes = [1, 256], strides = [1, 1]} : vector<3x256xf32> to vector<1x256xf32>
    %c255_i32_30 = arith.constant 255 : i32
    %90 = tpu.dynamic_rotate %89 by %c255_i32_30 dim 1 : vector<1x256xf32>, i32 -> vector<1x256xf32>
    %91 = arith.mulf %90, %5 : vector<1x256xf32>
    %92 = arith.addf %87, %91 : vector<1x256xf32>
    %93 = arith.addf %92, %88 : vector<1x256xf32>
    %94 = arith.mulf %93, %3 : vector<1x256xf32>
    %95 = arith.addf %84, %94 : vector<1x256xf32>
    %96 = vector.extract_strided_slice %57 {offsets = [9, 0], sizes = [1, 256], strides = [1, 1]} : vector<10x256xf32> to vector<1x256xf32>
    %97 = arith.addf %95, %96 : vector<1x256xf32>
    %98 = arith.addf %97, %59 : vector<1x256xf32>
    %99 = vector.broadcast %1 : f32 to vector<1x256xf32>
    %100 = arith.addf %98, %99 : vector<1x256xf32>
    %c1_31 = arith.constant 1 : index
    %c0_32 = arith.constant 0 : index
    %c0_33 = arith.constant 0 : index
    %101 = vector.load %arg5[%c1_31, %c0_32, %c0_33] : memref<2x1x256xf32, #tpu.memory_space<vmem>>, vector<1x1x256xf32>
    %102 = vector.shape_cast %101 : vector<1x1x256xf32> to vector<1x256xf32>
    %103 = vector.shape_cast %100 : vector<1x256xf32> to vector<1x1x256xf32>
    tpu.vector_store %arg5[%c1_31, %c0_32, %c0_33], %103 {strides = array<i32>} : memref<2x1x256xf32, #tpu.memory_space<vmem>>, vector<1x1x256xf32>,
    return
  }
  func.func @transform_0(%arg0: i32) -> (i32, i32, i32) {
    %c0_i32 = arith.constant 0 : i32
    %c0_i32_0 = arith.constant 0 : i32
    %c0_i32_1 = arith.constant 0 : i32
    return %arg0, %c0_i32, %c0_i32_0 : i32, i32, i32
  }
  func.func @transform_1(%arg0: i32) -> (i32, i32) {
    %c0_i32 = arith.constant 0 : i32
    %c0_i32_0 = arith.constant 0 : i32
    %c0_i32_1 = arith.constant 0 : i32
    return %c0_i32, %c0_i32_0 : i32, i32
  }
  func.func @transform_2(%arg0: i32) -> (i32, i32) {
    %c0_i32 = arith.constant 0 : i32
    %c0_i32_0 = arith.constant 0 : i32
    %c0_i32_1 = arith.constant 0 : i32
    return %c0_i32, %c0_i32_0 : i32, i32
  }
  func.func @transform_3(%arg0: i32) -> i32 {
    %c0_i32 = arith.constant 0 : i32
    %c0_i32_0 = arith.constant 0 : i32
    return %c0_i32 : i32
  }
  func.func @transform_4(%arg0: i32) -> (i32, i32, i32) {
    %c0_i32 = arith.constant 0 : i32
    %c0_i32_0 = arith.constant 0 : i32
    %c0_i32_1 = arith.constant 0 : i32
    return %arg0, %c0_i32, %c0_i32_0 : i32, i32, i32
  }
}

</mosaic_0001>

<llo_original>
// kernel: tpu_custom_call.1
$region0: #{tpu_custom_call.1}
  #allocation0 [shape = 'u32[]', space=smem, size = 0x4, offset = 0x4, fixed_abs, tag = 'smem constant byte address 0x4 - core index']
  #allocation1 [shape = 'u32[144,128]{1,0:T(1,128)}', space=vmem, size = 0x12000, scoped, tag = 'internal scratch']
  #allocation2 [shape = 'f32[1]{0:T(128)S(6)}', space=smem, size = 0x200, scoped, tag = 'scoped memory for tpu_custom_call.1']
  %s0 = inlined_call_operand.vmem [shape: f32[2,4,256], index: 0, kind: input, shape index: {}]
  %s1 = inlined_call_operand.vmem [shape: f32[10,4], index: 1, kind: input, shape index: {}]
  %s2 = inlined_call_operand.vmem [shape: f32[4,256], index: 2, kind: input, shape index: {}]
  %s3 = inlined_call_operand.<no memory space> [shape: f32[1], index: 3, kind: input, shape index: {}]
  %s4 = inlined_call_operand.hbm [shape: f32[2,1,256], index: 4, kind: output, shape index: {}]
  %s5 = sld [smem:[#allocation0]]
  $region26: #{tpu_custom_call.1} parent=0
    _
  %s7 = ssub.s32 1, %s5
  %s8 = scalar_select 0, %s7, %s5
  %9 = sst [smem:[#allocation2]] %s3
  $region1: #{tpu_custom_call.1} parent=0
    #allocation3 [shape = 'u8[2048]{0}', space=vmem, size = 0x800, scoped, tag = 'output window, operand 0, single buffered']
    #allocation4 [shape = 's32[1]{0}', space=sflag, size = 0x4, scoped, tag = 'scoped memory for tpu_custom_call.1']
    %10 = vsyncpa [#allocation4], 0
    // Predicated region
    $region2: #{tpu_custom_call.1} parent=1 // pred_check
      _
    $region3: #{tpu_custom_call.1} parent=1 // pred_check_branch
      %12 = sbr.rel (0) target = $region5
    $region4: #{tpu_custom_call.1} parent=1 // pred_region
      _
    $region5: #{tpu_custom_call.1} parent=1 // pred_fallthru
      _
    // Predicated region
    $region6: #{tpu_custom_call.1} parent=1 // pred_check
      _
    $region7: #{tpu_custom_call.1} parent=1 // pred_check_branch
      %14 = sbr.rel (0) target = $region9
    $region8: #{tpu_custom_call.1} parent=1 // pred_region
      _
    $region9: #{tpu_custom_call.1} parent=1 // pred_fallthru
      _
    // Predicated region
    $region10: #{tpu_custom_call.1} parent=1 // pred_check
      _
    $region11: #{tpu_custom_call.1} parent=1 // pred_check_branch
      %16 = sbr.rel (0) target = $region13
    $region12: #{tpu_custom_call.1} parent=1 // pred_region
      _
    $region13: #{tpu_custom_call.1} parent=1 // pred_fallthru
      _
    // Predicated region
    $region14: #{tpu_custom_call.1} parent=1 // pred_check
      _
    $region15: #{tpu_custom_call.1} parent=1 // pred_check_branch
      %18 = sbr.rel (0) target = $region17
    $region16: #{tpu_custom_call.1} parent=1 // pred_region
      _
    $region17: #{tpu_custom_call.1} parent=1 // pred_fallthru
      _
    %v19 = vld [vmem:[%s1] sm:$0xff]
    %v20 = vld [vmem:[%s1 + $0x8] sm:$0x3]
    %s21 = sld [smem:[#allocation2]]
    %v22 = vld [vmem:[%s2] ss:$4 sm:$0x3]
    %s23 = scalar_lea.vmem %s2, 1
    %v24 = vld [vmem:[%s23] ss:$4 sm:$0x3]
    %s25 = scalar_lea.vmem %s2, 2
    %v26 = vld [vmem:[%s25] ss:$4 sm:$0x3]
    %s27 = scalar_lea.vmem %s2, 3
    %v28 = vld [vmem:[%s27] ss:$4 sm:$0x3]
    %v29 = vld [vmem:[%s0] sm:$0xff]
    %v31 = vcombine.high %v29, %v29
    %vm32 = vcmask 31744
    %v34 = vsel %vm32, %v19, 0
    %v37 = vsel %vm32, %v20, 0
    %vm39 = vcmask 1043456
    %v40 = vsel %vm39, %v29, 0
    %v42 = vsel %vm39, %v31, 0
    %44 = vmatprep.subr.mxu0 %v42
    %45 = vmatpush1.msra.mxu0 %v40
    %46 = vmatprep.subr.mxu0 0.0
    %47 = vmatpush1.msra.mxu0 0.0
    %48 = vmatprep.subr.mxu0 0.0
    %49 = vmatpush1.msra.mxu0 0.0
    %50 = vmatprep.subr.mxu0 0.0
    %51 = vmatpush1.msra.mxu0 0.0
    %52 = vmatprep.subr.mxu0 0.0
    %53 = vmatpush1.msra.mxu0 0.0
    %54 = vmatprep.subr.mxu0 0.0
    %55 = vmatpush1.msra.mxu0 0.0
    %56 = vmatprep.subr.mxu0 0.0
    %57 = vmatpush1.msra.mxu0 0.0
    %58 = vmatprep.subr.mxu0 0.0
    %59 = vmatpush1.msra.mxu0 0.0
    %60 = vmatprep.subr.mxu0 0.0
    %61 = vmatpush1.msra.mxu0 0.0
    %62 = vmatprep.subr.mxu0 0.0
    %63 = vmatpush1.msra.mxu0 0.0
    %64 = vmatprep.subr.mxu0 0.0
    %65 = vmatpush1.msra.mxu0 0.0
    %66 = vmatprep.subr.mxu0 0.0
    %67 = vmatpush1.msra.mxu0 0.0
    %68 = vmatprep.subr.mxu0 0.0
    %69 = vmatpush1.msra.mxu0 0.0
    %70 = vmatprep.subr.mxu0 0.0
    %71 = vmatpush1.msra.mxu0 0.0
    %72 = vmatprep.subr.mxu0 0.0
    %73 = vmatpush1.msra.mxu0 0.0
    %74 = vmatprep.subr.mxu0 0.0
    %75 = vmatpush1.msra.mxu0 0.0
    %76 = vmatprep.subr.mxu0 0.0
    %77 = vmatpush1.msra.mxu0 0.0
    %78 = vmatprep.subr.mxu0 0.0
    %79 = vmatpush1.msra.mxu0 0.0
    %80 = vmatprep.subr.mxu0 0.0
    %81 = vmatpush1.msra.mxu0 0.0
    %82 = vmatprep.subr.mxu0 0.0
    %83 = vmatpush1.msra.mxu0 0.0
    %84 = vmatprep.subr.mxu0 0.0
    %85 = vmatpush1.msra.mxu0 0.0
    %86 = vmatprep.subr.mxu0 0.0
    %87 = vmatpush1.msra.mxu0 0.0
    %88 = vmatprep.subr.mxu0 0.0
    %89 = vmatpush1.msra.mxu0 0.0
    %90 = vmatprep.subr.mxu0 0.0
    %91 = vmatpush1.msra.mxu0 0.0
    %92 = vmatprep.subr.mxu0 0.0
    %93 = vmatpush1.msra.mxu0 0.0
    %94 = vmatprep.subr.mxu0 0.0
    %95 = vmatpush1.msra.mxu0 0.0
    %96 = vmatprep.subr.mxu0 0.0
    %97 = vmatpush1.msra.mxu0 0.0
    %98 = vmatprep.subr.mxu0 0.0
    %99 = vmatpush1.msra.mxu0 0.0
    %100 = vmatprep.subr.mxu0 0.0
    %101 = vmatpush1.msra.mxu0 0.0
    %102 = vmatprep.subr.mxu0 0.0
    %103 = vmatpush1.msra.mxu0 0.0
    %104 = vmatprep.subr.mxu0 0.0
    %105 = vmatpush1.msra.mxu0 0.0
    %106 = vmatprep.subr.mxu0 0.0
    %107 = vmatpush1.msra.mxu0 0.0
    %108 = vmatprep.mubr.f32.mxu0 0.0
    %109 = vmatmul.mubr.f32.gmra.mrb[0].mxu0 %v34
    %v110 = vpop.f32.mrb[0].mxu0
    %v111 = vadd.f32 0.0, %v110
    %v112 = vpop.f32.mrb[0].mxu0
    %v113 = vadd.f32 0.0, %v112
    %114 = vmatprep.mubr.f32.mxu0 0.0
    %115 = vmatmul.mubr.f32.gmra.mrb[0].mxu0 %v37
    %v116 = vpop.f32.mrb[0].mxu0
    %v117 = vadd.f32 0.0, %v116
    %v118 = vpop.f32.mrb[0].mxu0
    %v119 = vadd.f32 0.0, %v118
    %120 = vdwg.mxu0
    %v122 = vsel %vm39, %v29, -inf
    %v123 = vrot.slane %v122, 4
    %v124 = vmax.f32 %v122, %v123
    %v125 = vrot.slane %v124, 2
    %v126 = vmax.f32 %v124, %v125
    %v127 = vrot.slane %v126, 1
    %v128 = vmax.f32 %v126, %v127
    %v129 = vsel %vm39, %v31, -inf
    %v130 = vrot.slane %v129, 4
    %v131 = vmax.f32 %v129, %v130
    %v132 = vrot.slane %v131, 2
    %v133 = vmax.f32 %v131, %v132
    %v134 = vrot.slane %v133, 1
    %v135 = vmax.f32 %v133, %v134
    %136 = vrot.lane.b32.xlu0 %v111, 16
    %v137 = vpop.permute.xlu0 %136
    %138 = vrot.lane.b32.xlu0 %v113, 16
    %v139 = vpop.permute.xlu0 %138
    %v140 = vlaneseq
    %v141 = vand.u32 %v140, 127
    %vm142 = vcmp.lt.s32.totalorder %v141, 16
    %v143 = vsel %vm142, %v137, %v139
    %v144 = vsel %vm142, %v139, %v137
    %vm149 = vcmask 1041408
    %v150 = vrot.slane %v111, 6
    %v151 = vrot.slane %v117, 6
    %v152 = vsel %vm149, %v150, %v151
    %v153 = vrot.slane %v113, 6
    %v154 = vrot.slane %v119, 6
    %v155 = vsel %vm149, %v153, %v154
    %158 = vrot.lane.b32.xlu0 %v152, 112
    %v159 = vpop.permute.xlu0 %158
    %160 = vrot.lane.b32.xlu0 %v155, 112
    %v161 = vpop.permute.xlu0 %160
    %vm162 = vcmp.lt.s32.totalorder %v141, 112
    %v163 = vsel %vm162, %v159, %v161
    %v164 = vsel %vm162, %v161, %v159
    %165 = vrot.lane.b32.xlu0 %v144, 1
    %v166 = vpop.permute.xlu0 %165
    %167 = vrot.lane.b32.xlu0 %v143, 1
    %v168 = vpop.permute.xlu0 %167
    %vm169 = vcmp.lt.s32.totalorder %v141, 1
    %v170 = vsel %vm169, %v166, %v168
    %v171 = vsel %vm169, %v168, %v166
    %v173 = vlaneseq
    %v174 = vshrl.u32 %v173, 7
    %v175 = vsub.s32 0, %v174
    %v176 = vrot.slane %v26, %v175
    %v177 = vlaneseq
    %v178 = vshrl.u32 %v177, 7
    %v179 = vsub.s32 1, %v178
    %v180 = vrot.slane %v26, %v179
    %v183 = vmul.f32 %v171, %v176
    %v184 = vmul.f32 %v170, %v180
    %v187 = vrot.slane %v144, 2
    %v188 = vrot.slane %v143, 2
    %191 = vrot.lane.b32.xlu0 %v187, 127
    %v192 = vpop.permute.xlu0 %191
    %193 = vrot.lane.b32.xlu0 %v188, 127
    %v194 = vpop.permute.xlu0 %193
    %vm195 = vcmp.lt.s32.totalorder %v141, 127
    %v196 = vsel %vm195, %v192, %v194
    %v197 = vsel %vm195, %v194, %v192
    %v199 = vlaneseq
    %v200 = vshrl.u32 %v199, 7
    %v201 = vsub.s32 0, %v200
    %v202 = vrot.slane %v28, %v201
    %v203 = vlaneseq
    %v204 = vshrl.u32 %v203, 7
    %v205 = vsub.s32 1, %v204
    %v206 = vrot.slane %v28, %v205
    %v209 = vmul.f32 %v196, %v202
    %v210 = vmul.f32 %v197, %v206
    %v211 = vadd.f32 %v183, %v209
    %v212 = vadd.f32 %v184, %v210
    %v213 = vrot.slane %v144, 1
    %v214 = vrot.slane %v143, 1
    %v217 = vadd.f32 %v211, %v213
    %v218 = vadd.f32 %v212, %v214
    %v220 = vlaneseq
    %v221 = vshrl.u32 %v220, 7
    %v222 = vsub.s32 0, %v221
    %v223 = vrot.slane %v22, %v222
    %v224 = vlaneseq
    %v225 = vshrl.u32 %v224, 7
    %v226 = vsub.s32 1, %v225
    %v227 = vrot.slane %v22, %v226
    %v230 = vmul.f32 %v217, %v223
    %v231 = vmul.f32 %v218, %v227
    %v232 = vrot.slane %v111, 3
    %v233 = vrot.slane %v113, 3
    %236 = vrot.lane.b32.xlu0 %v232, 1
    %v237 = vpop.permute.xlu0 %236
    %238 = vrot.lane.b32.xlu0 %v233, 1
    %v239 = vpop.permute.xlu0 %238
    %v240 = vsel %vm169, %v237, %v239
    %v241 = vsel %vm169, %v239, %v237
    %v242 = vmul.f32 %v241, %v176
    %v243 = vmul.f32 %v240, %v180
    %v244 = vrot.slane %v111, 5
    %v245 = vrot.slane %v113, 5
    %248 = vrot.lane.b32.xlu0 %v244, 127
    %v249 = vpop.permute.xlu0 %248
    %250 = vrot.lane.b32.xlu0 %v245, 127
    %v251 = vpop.permute.xlu0 %250
    %v252 = vsel %vm195, %v249, %v251
    %v253 = vsel %vm195, %v251, %v249
    %v254 = vmul.f32 %v252, %v202
    %v255 = vmul.f32 %v253, %v206
    %v256 = vadd.f32 %v242, %v254
    %v257 = vadd.f32 %v243, %v255
    %v258 = vrot.slane %v111, 4
    %v259 = vrot.slane %v113, 4
    %v262 = vadd.f32 %v256, %v258
    %v263 = vadd.f32 %v257, %v259
    %v264 = vadd.f32 %v230, %v262
    %v265 = vadd.f32 %v231, %v263
    %266 = vrot.lane.b32.xlu0 %v163, 1
    %v267 = vpop.permute.xlu0 %266
    %268 = vrot.lane.b32.xlu0 %v164, 1
    %v269 = vpop.permute.xlu0 %268
    %v270 = vsel %vm169, %v267, %v269
    %v271 = vsel %vm169, %v269, %v267
    %v272 = vmul.f32 %v271, %v176
    %v273 = vmul.f32 %v270, %v180
    %v276 = vrot.slane %v163, 2
    %v277 = vrot.slane %v164, 2
    %280 = vrot.lane.b32.xlu0 %v276, 127
    %v281 = vpop.permute.xlu0 %280
    %282 = vrot.lane.b32.xlu0 %v277, 127
    %v283 = vpop.permute.xlu0 %282
    %v284 = vsel %vm195, %v281, %v283
    %v285 = vsel %vm195, %v283, %v281
    %v286 = vmul.f32 %v284, %v202
    %v287 = vmul.f32 %v285, %v206
    %v288 = vadd.f32 %v272, %v286
    %v289 = vadd.f32 %v273, %v287
    %v290 = vrot.slane %v163, 1
    %v291 = vrot.slane %v164, 1
    %v294 = vadd.f32 %v288, %v290
    %v295 = vadd.f32 %v289, %v291
    %v297 = vlaneseq
    %v298 = vshrl.u32 %v297, 7
    %v299 = vsub.s32 0, %v298
    %v300 = vrot.slane %v24, %v299
    %v301 = vlaneseq
    %v302 = vshrl.u32 %v301, 7
    %v303 = vsub.s32 1, %v302
    %v304 = vrot.slane %v24, %v303
    %v307 = vmul.f32 %v294, %v300
    %v308 = vmul.f32 %v295, %v304
    %v309 = vadd.f32 %v264, %v307
    %v310 = vadd.f32 %v265, %v308
    %v311 = vrot.slane %v117, 1
    %v312 = vrot.slane %v119, 1
    %v315 = vadd.f32 %v309, %v311
    %v316 = vadd.f32 %v310, %v312
    %v317 = vadd.f32 %v315, %v128
    %v318 = vadd.f32 %v316, %v135
    %v319 = vstv %s21
    %v320 = vadd.f32 %v317, %v319
    %v321 = vadd.f32 %v318, %v319
    %v324 = vcombine.low %v320, %v321
    %v326 = vunpack.c.l.s4 1966171168
    %v327 = vunpack.c.0.s8 %v326
    %v328 = vlaneseq
    %v329 = vshrl.u32 %v328, 7
    %v330 = vsub.s32 %v327, %v329
    %v331 = vrot.slane %v324, %v330
    %v333 = vunpack.c.l.s4 1966171168
    %v334 = vunpack.c.0.s8 %v333
    %v335 = vlaneseq
    %v336 = vshrl.u32 %v335, 7
    %v337 = vsub.s32 %v334, %v336
    %v338 = vrot.slane %v331, %v337
    %v340 = vlaneseq
    %vm341 = vcmp.ge.s32.totalorder %v340, 0
    %vm342 = vcmp.lt.s32.totalorder %v340, 256
    %vm343 = vmand %vm341, %vm342
    %344 = vst.msk [vmem:[#allocation3] sm:$0x3] %vm343, %v338
    %s345 = scalar_lea.vmem %s0, 8
    %v346 = vld [vmem:[%s345] sm:$0xff]
    %v348 = vcombine.high %v346, %v346
    %v349 = vsel %vm39, %v346, 0
    %v351 = vsel %vm39, %v348, 0
    %353 = vmatprep.subr.mxu0 %v351
    %354 = vmatpush1.msra.mxu0 %v349
    %355 = vmatprep.subr.mxu0 0.0
    %356 = vmatpush1.msra.mxu0 0.0
    %357 = vmatprep.subr.mxu0 0.0
    %358 = vmatpush1.msra.mxu0 0.0
    %359 = vmatprep.subr.mxu0 0.0
    %360 = vmatpush1.msra.mxu0 0.0
    %361 = vmatprep.subr.mxu0 0.0
    %362 = vmatpush1.msra.mxu0 0.0
    %363 = vmatprep.subr.mxu0 0.0
    %364 = vmatpush1.msra.mxu0 0.0
    %365 = vmatprep.subr.mxu0 0.0
    %366 = vmatpush1.msra.mxu0 0.0
    %367 = vmatprep.subr.mxu0 0.0
    %368 = vmatpush1.msra.mxu0 0.0
    %369 = vmatprep.subr.mxu0 0.0
    %370 = vmatpush1.msra.mxu0 0.0
    %371 = vmatprep.subr.mxu0 0.0
    %372 = vmatpush1.msra.mxu0 0.0
    %373 = vmatprep.subr.mxu0 0.0
    %374 = vmatpush1.msra.mxu0 0.0
    %375 = vmatprep.subr.mxu0 0.0
    %376 = vmatpush1.msra.mxu0 0.0
    %377 = vmatprep.subr.mxu0 0.0
    %378 = vmatpush1.msra.mxu0 0.0
    %379 = vmatprep.subr.mxu0 0.0
    %380 = vmatpush1.msra.mxu0 0.0
    %381 = vmatprep.subr.mxu0 0.0
    %382 = vmatpush1.msra.mxu0 0.0
    %383 = vmatprep.subr.mxu0 0.0
    %384 = vmatpush1.msra.mxu0 0.0
    %385 = vmatprep.subr.mxu0 0.0
    %386 = vmatpush1.msra.mxu0 0.0
    %387 = vmatprep.subr.mxu0 0.0
    %388 = vmatpush1.msra.mxu0 0.0
    %389 = vmatprep.subr.mxu0 0.0
    %390 = vmatpush1.msra.mxu0 0.0
    %391 = vmatprep.subr.mxu0 0.0
    %392 = vmatpush1.msra.mxu0 0.0
    %393 = vmatprep.subr.mxu0 0.0
    %394 = vmatpush1.msra.mxu0 0.0
    %395 = vmatprep.subr.mxu0 0.0
    %396 = vmatpush1.msra.mxu0 0.0
    %397 = vmatprep.subr.mxu0 0.0
    %398 = vmatpush1.msra.mxu0 0.0
    %399 = vmatprep.subr.mxu0 0.0
    %400 = vmatpush1.msra.mxu0 0.0
    %401 = vmatprep.subr.mxu0 0.0
    %402 = vmatpush1.msra.mxu0 0.0
    %403 = vmatprep.subr.mxu0 0.0
    %404 = vmatpush1.msra.mxu0 0.0
    %405 = vmatprep.subr.mxu0 0.0
    %406 = vmatpush1.msra.mxu0 0.0
    %407 = vmatprep.subr.mxu0 0.0
    %408 = vmatpush1.msra.mxu0 0.0
    %409 = vmatprep.subr.mxu0 0.0
    %410 = vmatpush1.msra.mxu0 0.0
    %411 = vmatprep.subr.mxu0 0.0
    %412 = vmatpush1.msra.mxu0 0.0
    %413 = vmatprep.subr.mxu0 0.0
    %414 = vmatpush1.msra.mxu0 0.0
    %415 = vmatprep.subr.mxu0 0.0
    %416 = vmatpush1.msra.mxu0 0.0
    %417 = vmatprep.mubr.f32.mxu0 0.0
    %418 = vmatmul.mubr.f32.gmra.mrb[0].mxu0 %v34
    %v419 = vpop.f32.mrb[0].mxu0
    %v420 = vadd.f32 0.0, %v419
    %v421 = vpop.f32.mrb[0].mxu0
    %v422 = vadd.f32 0.0, %v421
    %423 = vmatprep.mubr.f32.mxu0 0.0
    %424 = vmatmul.mubr.f32.gmra.mrb[0].mxu0 %v37
    %v425 = vpop.f32.mrb[0].mxu0
    %v426 = vadd.f32 0.0, %v425
    %v427 = vpop.f32.mrb[0].mxu0
    %v428 = vadd.f32 0.0, %v427
    %429 = vdwg.mxu0
    %v431 = vsel %vm39, %v346, -inf
    %v432 = vrot.slane %v431, 4
    %v433 = vmax.f32 %v431, %v432
    %v434 = vrot.slane %v433, 2
    %v435 = vmax.f32 %v433, %v434
    %v436 = vrot.slane %v435, 1
    %v437 = vmax.f32 %v435, %v436
    %v438 = vsel %vm39, %v348, -inf
    %v439 = vrot.slane %v438, 4
    %v440 = vmax.f32 %v438, %v439
    %v441 = vrot.slane %v440, 2
    %v442 = vmax.f32 %v440, %v441
    %v443 = vrot.slane %v442, 1
    %v444 = vmax.f32 %v442, %v443
    %445 = vrot.lane.b32.xlu0 %v420, 16
    %v446 = vpop.permute.xlu0 %445
    %447 = vrot.lane.b32.xlu0 %v422, 16
    %v448 = vpop.permute.xlu0 %447
    %v449 = vsel %vm142, %v446, %v448
    %v450 = vsel %vm142, %v448, %v446
    %v455 = vrot.slane %v420, 6
    %v456 = vrot.slane %v426, 6
    %v457 = vsel %vm149, %v455, %v456
    %v458 = vrot.slane %v422, 6
    %v459 = vrot.slane %v428, 6
    %v460 = vsel %vm149, %v458, %v459
    %463 = vrot.lane.b32.xlu0 %v457, 112
    %v464 = vpop.permute.xlu0 %463
    %465 = vrot.lane.b32.xlu0 %v460, 112
    %v466 = vpop.permute.xlu0 %465
    %v467 = vsel %vm162, %v464, %v466
    %v468 = vsel %vm162, %v466, %v464
    %469 = vrot.lane.b32.xlu0 %v450, 1
    %v470 = vpop.permute.xlu0 %469
    %471 = vrot.lane.b32.xlu0 %v449, 1
    %v472 = vpop.permute.xlu0 %471
    %v473 = vsel %vm169, %v470, %v472
    %v474 = vsel %vm169, %v472, %v470
    %v475 = vmul.f32 %v474, %v176
    %v476 = vmul.f32 %v473, %v180
    %v479 = vrot.slane %v450, 2
    %v480 = vrot.slane %v449, 2
    %483 = vrot.lane.b32.xlu0 %v479, 127
    %v484 = vpop.permute.xlu0 %483
    %485 = vrot.lane.b32.xlu0 %v480, 127
    %v486 = vpop.permute.xlu0 %485
    %v487 = vsel %vm195, %v484, %v486
    %v488 = vsel %vm195, %v486, %v484
    %v489 = vmul.f32 %v487, %v202
    %v490 = vmul.f32 %v488, %v206
    %v491 = vadd.f32 %v475, %v489
    %v492 = vadd.f32 %v476, %v490
    %v493 = vrot.slane %v450, 1
    %v494 = vrot.slane %v449, 1
    %v497 = vadd.f32 %v491, %v493
    %v498 = vadd.f32 %v492, %v494
    %v499 = vmul.f32 %v497, %v223
    %v500 = vmul.f32 %v498, %v227
    %v501 = vrot.slane %v420, 3
    %v502 = vrot.slane %v422, 3
    %505 = vrot.lane.b32.xlu0 %v501, 1
    %v506 = vpop.permute.xlu0 %505
    %507 = vrot.lane.b32.xlu0 %v502, 1
    %v508 = vpop.permute.xlu0 %507
    %v509 = vsel %vm169, %v506, %v508
    %v510 = vsel %vm169, %v508, %v506
    %v511 = vmul.f32 %v510, %v176
    %v512 = vmul.f32 %v509, %v180
    %v513 = vrot.slane %v420, 5
    %v514 = vrot.slane %v422, 5
    %517 = vrot.lane.b32.xlu0 %v513, 127
    %v518 = vpop.permute.xlu0 %517
    %519 = vrot.lane.b32.xlu0 %v514, 127
    %v520 = vpop.permute.xlu0 %519
    %v521 = vsel %vm195, %v518, %v520
    %v522 = vsel %vm195, %v520, %v518
    %v523 = vmul.f32 %v521, %v202
    %v524 = vmul.f32 %v522, %v206
    %v525 = vadd.f32 %v511, %v523
    %v526 = vadd.f32 %v512, %v524
    %v527 = vrot.slane %v420, 4
    %v528 = vrot.slane %v422, 4
    %v531 = vadd.f32 %v525, %v527
    %v532 = vadd.f32 %v526, %v528
    %v533 = vadd.f32 %v499, %v531
    %v534 = vadd.f32 %v500, %v532
    %535 = vrot.lane.b32.xlu0 %v467, 1
    %v536 = vpop.permute.xlu0 %535
    %537 = vrot.lane.b32.xlu0 %v468, 1
    %v538 = vpop.permute.xlu0 %537
    %v539 = vsel %vm169, %v536, %v538
    %v540 = vsel %vm169, %v538, %v536
    %v541 = vmul.f32 %v540, %v176
    %v542 = vmul.f32 %v539, %v180
    %v545 = vrot.slane %v467, 2
    %v546 = vrot.slane %v468, 2
    %549 = vrot.lane.b32.xlu0 %v545, 127
    %v550 = vpop.permute.xlu0 %549
    %551 = vrot.lane.b32.xlu0 %v546, 127
    %v552 = vpop.permute.xlu0 %551
    %v553 = vsel %vm195, %v550, %v552
    %v554 = vsel %vm195, %v552, %v550
    %v555 = vmul.f32 %v553, %v202
    %v556 = vmul.f32 %v554, %v206
    %v557 = vadd.f32 %v541, %v555
    %v558 = vadd.f32 %v542, %v556
    %v559 = vrot.slane %v467, 1
    %v560 = vrot.slane %v468, 1
    %v563 = vadd.f32 %v557, %v559
    %v564 = vadd.f32 %v558, %v560
    %v565 = vmul.f32 %v563, %v300
    %v566 = vmul.f32 %v564, %v304
    %v567 = vadd.f32 %v533, %v565
    %v568 = vadd.f32 %v534, %v566
    %v569 = vrot.slane %v426, 1
    %v570 = vrot.slane %v428, 1
    %v573 = vadd.f32 %v567, %v569
    %v574 = vadd.f32 %v568, %v570
    %v575 = vadd.f32 %v573, %v437
    %v576 = vadd.f32 %v574, %v444
    %v577 = vadd.f32 %v575, %v319
    %v578 = vadd.f32 %v576, %v319
    %v581 = vcombine.low %v577, %v578
    %v583 = vunpack.c.l.s4 1966171168
    %v584 = vunpack.c.0.s8 %v583
    %v585 = vlaneseq
    %v586 = vshrl.u32 %v585, 7
    %v587 = vsub.s32 %v584, %v586
    %v588 = vrot.slane %v581, %v587
    %v590 = vunpack.c.l.s4 1966171168
    %v591 = vunpack.c.0.s8 %v590
    %v592 = vlaneseq
    %v593 = vshrl.u32 %v592, 7
    %v594 = vsub.s32 %v591, %v593
    %v595 = vrot.slane %v588, %v594
    %s597 = scalar_lea.vmem [#allocation3], 2
    %598 = vst.msk [vmem:[%s597] sm:$0x3] %vm343, %v595
    // Predicated region
    $region18: #{tpu_custom_call.1} parent=1 // pred_check
      _
    $region19: #{tpu_custom_call.1} parent=1 // pred_check_branch
      %600 = sbr.rel (0) target = $region21
    $region20: #{tpu_custom_call.1} parent=1 // pred_region
      %s602 = ssub.s32 64, 64
      %603 = vsyncadd [#allocation4], %s602
      %s604 = sshll.u32 [#allocation3], 4
      %s605 = int_to_ptr.vmem [resolvable:$true] %s604
      %610 = dma.vmem_to_hbm [thread:$0]  %s605, 64, %s4, [#allocation4], 32, 32, 2
    $region21: #{tpu_custom_call.1} parent=1 // pred_fallthru
      _
    // Predicated region
    $region22: #{tpu_custom_call.1} parent=1 // pred_check
      _
    $region23: #{tpu_custom_call.1} parent=1 // pred_check_branch
      %612 = sbr.rel (0) target = $region25
    $region24: #{tpu_custom_call.1} parent=1 // pred_region
      %613 = dma.done [#allocation4], 64
    $region25: #{tpu_custom_call.1} parent=1 // pred_fallthru
      _
    %614 = vsyncpa [#allocation4], 1

</llo_original>
